<compile_context>
chip_gen: v7x
topology: tpu7x:2x2x1
jax: 0.10.0
libtpu: 0.0.40
codegen_flags: <defaults>
</compile_context>

<pallas_src>
import math

import jax
import jax.numpy as jnp
from jax.experimental import pallas as pl
from jax.experimental.pallas import tpu as pltpu


def _linear_nobias_kernel(x_ref, wt_ref, o_ref, acc_ref):
    # x_ref  : [tm, tk] input tile (any float dtype; cast to weight dtype for the MXU)
    # wt_ref : [tk, tn] pre-transposed bf16 weight tile
    # o_ref  : [tm, tn] f32 output tile (same block across the K axis)
    # acc_ref: [tm, tn] f32 accumulator scratch, resident across the K axis
    @pl.when(pl.program_id(2) == 0)
    def _init():
        acc_ref[...] = jnp.zeros_like(acc_ref)

    acc_ref[...] += jnp.dot(
        x_ref[...].astype(wt_ref.dtype), wt_ref[...],
        preferred_element_type=jnp.float32)

    @pl.when(pl.program_id(2) == pl.num_programs(2) - 1)
    def _finalize():
        o_ref[...] = acc_ref[...].astype(o_ref.dtype)


def _pick_tile(dim, candidates):
    """Largest aligned candidate that divides `dim`; fall back to the full dim
    (a block equal to the full array dim is always legal)."""
    for c in candidates:
        if c <= dim and dim % c == 0:
            return c
    return dim


def init_params(key, input_size, h_size, output_size, weight_dtype=jnp.bfloat16):
    """Mirror torch nn.Linear(h_size, output_size, bias=False) init; pre-layout the weight."""
    bound = 1.0 / math.sqrt(h_size)
    # torch Linear weight layout: [output_size, h_size]
    W = jax.random.uniform(key, (output_size, h_size), jnp.float32,
                           minval=-bound, maxval=bound)

    # Hoisted per-call glue: transpose once + bf16-convert once at init.  No lane
    # padding: the forward picks legal tiles without it, avoiding the padded-traffic
    # blow-up when output_size << 128.
    # TODO(synk): for very large h_size/output_size that are NOT multiples of 128,
    # zero-pad the corresponding weight dims here (and x's lanes at data-layout time)
    # so N/K can still be tiled instead of falling back to a full-dimension block.
    W_t = W.T.astype(weight_dtype)          # [h_size, output_size]
    return {"W": W, "W_t": W_t}


@jax.jit
def mymodel_forward(params, x):
    """out = x @ W.T  (bias-free Linear), x: [B, h_size] -> [B, output_size] (f32)."""
    W_t = params["W_t"]                      # [H, O], bf16, transposed at init
    B, H = x.shape
    H_w, O = W_t.shape
    assert H == H_w

    # Per-dimension tile selection (largest (8,128)-aligned divisor, else full dim).
    tm = _pick_tile(B, (256, 128, 64, 32, 16, 8))
    tn = _pick_tile(O, (512, 256, 128))
    tk = _pick_tile(H, (512, 256, 128))
    grid = (B // tm, O // tn, H // tk)       # reduction (K) axis last

    # Advisory cost + explicit scoped-VMEM budget (double-buffered tiles + accumulator).
    x_bytes = x.size * x.dtype.itemsize
    w_bytes = W_t.size * W_t.dtype.itemsize
    o_bytes = B * O * 4
    cost = pl.CostEstimate(flops=2 * B * H * O, transcendentals=0,
                           bytes_accessed=x_bytes + w_bytes + o_bytes)
    step_bytes = (tm * tk * x.dtype.itemsize
                  + tk * tn * W_t.dtype.itemsize
                  + tm * tn * 4)
    vmem_limit = int(min(64 * 1024 * 1024,
                         max(16 * 1024 * 1024, 4 * step_bytes + tm * tn * 4)))

    x_spec = pl.BlockSpec((tm, tk), lambda i, j, k: (i, k))
    if grid[1] * grid[2] >= 3:
        # Small-batch regime is weight-DMA bound: stream weight tiles 3 deep.
        wt_spec = pl.BlockSpec((tk, tn), lambda i, j, k: (k, j),
                               pipeline_mode=pl.Buffered(3))
    else:
        wt_spec = pl.BlockSpec((tk, tn), lambda i, j, k: (k, j))
    out_spec = pl.BlockSpec((tm, tn), lambda i, j, k: (i, j))

    return pl.pallas_call(
        _linear_nobias_kernel,
        out_shape=jax.ShapeDtypeStruct((B, O), jnp.float32),
        grid_spec=pltpu.PrefetchScalarGridSpec(
            num_scalar_prefetch=0,
            grid=grid,
            in_specs=[x_spec, wt_spec],
            out_specs=out_spec,
            scratch_shapes=[pltpu.VMEM((tm, tn), jnp.float32)]),
        compiler_params=pltpu.CompilerParams(
            dimension_semantics=("parallel", "parallel", "arbitrary"),
            vmem_limit_bytes=vmem_limit),
        cost_estimate=cost,
    )(x, W_t)


def mymodel_reference_f32(params, x):
    """Pure-JAX f32 reference with torch semantics (out = x @ W.T)."""
    return x @ params["W"].T


def mymodel_reference_bf16(params, x):
    """Reference with the same bf16 input/weight quantization as the kernel's MXU path."""
    xb = x.astype(jnp.bfloat16).astype(jnp.float32)
    wb = params["W"].astype(jnp.bfloat16).astype(jnp.float32)
    return xb @ wb.T


if __name__ == "__main__":
    key = jax.random.PRNGKey(0)
    kp, kx = jax.random.split(key)

    # Small shapes consistent with the module: MyModel(input_size, h_size, output_size)
    input_size, h_size, output_size = 16, 32, 8
    batch = 8

    params = init_params(kp, input_size, h_size, output_size)
    x = jax.random.normal(kx, (batch, h_size), jnp.float32)

    out = jax.block_until_ready(mymodel_forward(params, x))

    ref_bf16 = mymodel_reference_bf16(params, x)   # tight (matches kernel quantization)
    ref_f32 = mymodel_reference_f32(params, x)     # loose (bf16 quantization of W and x)

    assert out.shape == (batch, output_size)
    assert jnp.allclose(out, ref_bf16, atol=2e-3, rtol=2e-3)
    assert jnp.allclose(out, ref_f32, atol=5e-2, rtol=5e-2)
    print("KERNEL_OK")
</pallas_src>

<mosaic_0001>
module attributes {stable_mosaic.version = 11 : i64} {
  func.func @_linear_nobias_kernel(%arg0: i32, %arg1: i32, %arg2: i32, %arg3: memref<8x32xf32, #tpu.memory_space<vmem>>, %arg4: memref<32x8xbf16, #tpu.memory_space<vmem>>, %arg5: memref<8x8xf32, #tpu.memory_space<vmem>>, %arg6: memref<8x8xf32, #tpu.memory_space<vmem>>) attributes {dimension_semantics = [#tpu.dimension_semantics<parallel>, #tpu.dimension_semantics<parallel>, #tpu.dimension_semantics<arbitrary>], iteration_bounds = array<i64: 1, 1, 1>, scalar_prefetch = 0 : i64, scratch_operands = 1 : i64, tpu.core_type = #tpu.core_type<tc>, window_params = [{transform_indices = @transform_0, window_bounds = array<i64: 8, 32>}, {transform_indices = @transform_1, window_bounds = array<i64: 32, 8>}, {transform_indices = @transform_2, window_bounds = array<i64: 8, 8>}]} {
    %c0_i32 = arith.constant 0 : i32
    %0 = arith.cmpi eq, %arg2, %c0_i32 : i32
    %1 = arith.extui %0 : i1 to i32
    %c0_i32_0 = arith.constant 0 : i32
    %2 = arith.cmpi ne, %1, %c0_i32_0 : i32
    scf.if %2 {
      %cst_10 = arith.constant 0.000000e+00 : f32
      %13 = vector.broadcast %cst_10 : f32 to vector<8x8xf32>
      %c0_11 = arith.constant 0 : index
      %c0_12 = arith.constant 0 : index
      %14 = vector.load %arg6[%c0_11, %c0_12] : memref<8x8xf32, #tpu.memory_space<vmem>>, vector<8x8xf32>
      tpu.vector_store %arg6[%c0_11, %c0_12], %13 {strides = array<i32>} : memref<8x8xf32, #tpu.memory_space<vmem>>, vector<8x8xf32>,
    } else {
    }
    %c0 = arith.constant 0 : index
    %c0_1 = arith.constant 0 : index
    %3 = vector.load %arg6[%c0, %c0_1] : memref<8x8xf32, #tpu.memory_space<vmem>>, vector<8x8xf32>
    %c0_2 = arith.constant 0 : index
    %c0_3 = arith.constant 0 : index
    %4 = vector.load %arg3[%c0_2, %c0_3] : memref<8x32xf32, #tpu.memory_space<vmem>>, vector<8x32xf32>
    %5 = arith.truncf %4 : vector<8x32xf32> to vector<8x32xbf16>
    %c0_4 = arith.constant 0 : index
    %c0_5 = arith.constant 0 : index
    %6 = vector.load %arg4[%c0_4, %c0_5] : memref<32x8xbf16, #tpu.memory_space<vmem>>, vector<32x8xbf16>
    %cst = arith.constant dense<0.000000e+00> : vector<8x8xf32>
    %7 = tpu.matmul %5, %6, %cst {dimension_numbers = #tpu.dot_dimension_numbers<[1], [0], [0], [1], [0, 0, 1, 1], [], []>} : vector<8x32xbf16>, vector<32x8xbf16>, vector<8x8xf32> -> vector<8x8xf32>
    %8 = arith.addf %3, %7 : vector<8x8xf32>
    %c0_6 = arith.constant 0 : index
    %c0_7 = arith.constant 0 : index
    %9 = vector.load %arg6[%c0_6, %c0_7] : memref<8x8xf32, #tpu.memory_space<vmem>>, vector<8x8xf32>
    tpu.vector_store %arg6[%c0_6, %c0_7], %8 {strides = array<i32>} : memref<8x8xf32, #tpu.memory_space<vmem>>, vector<8x8xf32>,
    %c0_i32_8 = arith.constant 0 : i32
    %10 = arith.cmpi eq, %arg2, %c0_i32_8 : i32
    %11 = arith.extui %10 : i1 to i32
    %c0_i32_9 = arith.constant 0 : i32
    %12 = arith.cmpi ne, %11, %c0_i32_9 : i32
    scf.if %12 {
      %c0_10 = arith.constant 0 : index
      %c0_11 = arith.constant 0 : index
      %13 = vector.load %arg6[%c0_10, %c0_11] : memref<8x8xf32, #tpu.memory_space<vmem>>, vector<8x8xf32>
      %c0_12 = arith.constant 0 : index
      %c0_13 = arith.constant 0 : index
      %14 = vector.load %arg5[%c0_12, %c0_13] : memref<8x8xf32, #tpu.memory_space<vmem>>, vector<8x8xf32>
      tpu.vector_store %arg5[%c0_12, %c0_13], %13 {strides = array<i32>} : memref<8x8xf32, #tpu.memory_space<vmem>>, vector<8x8xf32>,
    } else {
    }
    return
  }
  func.func @transform_0(%arg0: i32, %arg1: i32, %arg2: i32) -> (i32, i32) {
    %c0_i32 = arith.constant 0 : i32
    return %arg0, %arg2 : i32, i32
  }
  func.func @transform_1(%arg0: i32, %arg1: i32, %arg2: i32) -> (i32, i32) {
    %c0_i32 = arith.constant 0 : i32
    return %arg2, %arg1 : i32, i32
  }
  func.func @transform_2(%arg0: i32, %arg1: i32, %arg2: i32) -> (i32, i32) {
    %c0_i32 = arith.constant 0 : i32
    return %arg0, %arg1 : i32, i32
  }
}

</mosaic_0001>

<llo_original>
// kernel: mymodel_forward.1
$region0: #{mymodel_forward.1}
  #allocation0 [shape = 'u32[]', space=smem, size = 0x4, offset = 0x4, fixed_abs, tag = 'smem constant byte address 0x4 - core index']
  #allocation1 [shape = 'u32[144,128]{1,0:T(1,128)}', space=vmem, size = 0x12000, scoped, tag = 'internal scratch']
  #allocation2 [shape = 'f32[8,8]{1,0:T(8,128)}', space=vmem, size = 0x1000, scoped, tag = 'scratch operand']
  %s0 = inlined_call_operand.vmem [shape: f32[8,32], index: 0, kind: input, shape index: {}]
  %s1 = inlined_call_operand.vmem [shape: bf16[32,8], index: 1, kind: input, shape index: {}]
  %s2 = inlined_call_operand.hbm [shape: f32[8,8], index: 2, kind: output, shape index: {}]
  %s3 = sld [smem:[#allocation0]]
  $region26: #{mymodel_forward.1} parent=0
    _
  %s5 = ssub.s32 1, %s3
  %s6 = scalar_select 0, %s5, %s3
  $region1: #{mymodel_forward.1} parent=0
    #allocation3 [shape = 'u8[4096]{0}', space=vmem, size = 0x1000, scoped, tag = 'output window, operand 0, single buffered']
    #allocation4 [shape = 's32[1]{0}', space=sflag, size = 0x4, scoped, tag = 'scoped memory for mymodel_forward.1']
    %7 = vsyncpa [#allocation4], 0
    // Predicated region
    $region2: #{mymodel_forward.1} parent=1 // pred_check
      _
    $region3: #{mymodel_forward.1} parent=1 // pred_check_branch
      %9 = sbr.rel (0) target = $region5
    $region4: #{mymodel_forward.1} parent=1 // pred_region
      _
    $region5: #{mymodel_forward.1} parent=1 // pred_fallthru
      _
    // Predicated region
    $region6: #{mymodel_forward.1} parent=1 // pred_check
      _
    $region7: #{mymodel_forward.1} parent=1 // pred_check_branch
      %11 = sbr.rel (0) target = $region9
    $region8: #{mymodel_forward.1} parent=1 // pred_region
      _
    $region9: #{mymodel_forward.1} parent=1 // pred_fallthru
      _
    %p13 = scmp.eq.s32.totalorder 0, 0
    // Predicated region
    $region10: #{mymodel_forward.1} parent=1 // pred_check
      %p14 = pneg %p13
    $region11: #{mymodel_forward.1} parent=1 // pred_check_branch
      %16 = sbr.rel (%p14) target = $region13
    $region12: #{mymodel_forward.1} parent=1 // pred_region
      %vm17 = vcmask 64512
      %18 = vst.msk [vmem:[#allocation2] sm:$0xff] %vm17, 0.0
    $region13: #{mymodel_forward.1} parent=1 // pred_fallthru
      _
    %v19 = vld [vmem:[#allocation2] sm:$0xff]
    %v20 = vld [vmem:[%s0] sm:$0xff]
    %v21 = vpack.c.bf16 %v20, %v20
    %v22 = vld [vmem:[%s1] sm:$0xf]
    %v23 = vld [vmem:[%s1 + $0x4] sm:$0xf]
    %v24 = vld [vmem:[%s1 + $0x8] sm:$0xf]
    %v25 = vld [vmem:[%s1 + $0xc] sm:$0xf]
    %v30 = vunpack.c.l.b16 %v22
    %v31 = vunpack.c.l.b16 %v23
    %v32 = vunpack.c.l.b16 %v24
    %v33 = vunpack.c.l.b16 %v25
    %v34 = vpack.c.b16 %v31, %v30
    %v35 = vpack.c.b16 %v33, %v32
    %vm38 = vcmask 261120
    %v40 = vsel %vm38, %v21, 0
    %42 = vmatprep.subr.bf16.mxu0 0
    %43 = vmatpush1.bf16.msra.mxu0 %v34
    %44 = vmatprep.subr.bf16.mxu0 0
    %45 = vmatpush1.bf16.msra.mxu0 %v35
    %46 = vmatprep.subr.bf16.mxu0 0
    %47 = vmatpush1.bf16.msra.mxu0 0
    %48 = vmatprep.subr.bf16.mxu0 0
    %49 = vmatpush1.bf16.msra.mxu0 0
    %50 = vmatprep.subr.bf16.mxu0 0
    %51 = vmatpush1.bf16.msra.mxu0 0
    %52 = vmatprep.subr.bf16.mxu0 0
    %53 = vmatpush1.bf16.msra.mxu0 0
    %54 = vmatprep.subr.bf16.mxu0 0
    %55 = vmatpush1.bf16.msra.mxu0 0
    %56 = vmatprep.subr.bf16.mxu0 0
    %57 = vmatpush1.bf16.msra.mxu0 0
    %58 = vmatprep.subr.bf16.mxu0 0
    %59 = vmatpush1.bf16.msra.mxu0 0
    %60 = vmatprep.subr.bf16.mxu0 0
    %61 = vmatpush1.bf16.msra.mxu0 0
    %62 = vmatprep.subr.bf16.mxu0 0
    %63 = vmatpush1.bf16.msra.mxu0 0
    %64 = vmatprep.subr.bf16.mxu0 0
    %65 = vmatpush1.bf16.msra.mxu0 0
    %66 = vmatprep.subr.bf16.mxu0 0
    %67 = vmatpush1.bf16.msra.mxu0 0
    %68 = vmatprep.subr.bf16.mxu0 0
    %69 = vmatpush1.bf16.msra.mxu0 0
    %70 = vmatprep.subr.bf16.mxu0 0
    %71 = vmatpush1.bf16.msra.mxu0 0
    %72 = vmatprep.subr.bf16.mxu0 0
    %73 = vmatpush1.bf16.msra.mxu0 0
    %74 = vmatprep.mubr.bf16.mxu0 0
    %75 = vmatmul.mubr.bf16.gmra.mrb[0].mxu0 %v40
    %v76 = vpop.f32.mrb[0].mxu0
    %v77 = vadd.f32 0.0, %v76
    %v78 = vpop.f32.mrb[0].mxu0
    %v79 = vpop.f32.mrb[0].mxu0
    %v80 = vpop.f32.mrb[0].mxu0
    %81 = vdwg.mxu0
    %v82 = vadd.f32 %v19, %v77
    %vm83 = vcmask 64512
    %84 = vst.msk [vmem:[#allocation2] sm:$0xff] %vm83, %v82
    // Predicated region
    $region14: #{mymodel_forward.1} parent=1 // pred_check
      %p85 = pneg %p13
    $region15: #{mymodel_forward.1} parent=1 // pred_check_branch
      %87 = sbr.rel (%p85) target = $region17
    $region16: #{mymodel_forward.1} parent=1 // pred_region
      %v88 = vld [vmem:[#allocation2] sm:$0xff]
      %89 = vst.msk [vmem:[#allocation3] sm:$0xff] %vm83, %v88
    $region17: #{mymodel_forward.1} parent=1 // pred_fallthru
      _
    // Predicated region
    $region18: #{mymodel_forward.1} parent=1 // pred_check
      _
    $region19: #{mymodel_forward.1} parent=1 // pred_check_branch
      %91 = sbr.rel (0) target = $region21
    $region20: #{mymodel_forward.1} parent=1 // pred_region
      %s93 = ssub.s32 128, 128
      %94 = vsyncadd [#allocation4], %s93
      %s96 = sshll.u32 [#allocation3], 4
      %s97 = int_to_ptr.vmem [resolvable:$true] %s96
      %99 = dma.vmem_to_hbm [thread:$0]  %s97, 128, %s2, [#allocation4]
    $region21: #{mymodel_forward.1} parent=1 // pred_fallthru
      _
    // Predicated region
    $region22: #{mymodel_forward.1} parent=1 // pred_check
      _
    $region23: #{mymodel_forward.1} parent=1 // pred_check_branch
      %101 = sbr.rel (0) target = $region25
    $region24: #{mymodel_forward.1} parent=1 // pred_region
      %102 = dma.done [#allocation4], 128
    $region25: #{mymodel_forward.1} parent=1 // pred_fallthru
      _
    %103 = vsyncpa [#allocation4], 1

</llo_original>
